<compile_context>
chip_gen: v7x
topology: tpu7x:2x2x1
jax: 0.10.0
libtpu: 0.0.40
codegen_flags: <defaults>
</compile_context>

<pallas_src>
import math
from functools import partial

import jax
import jax.numpy as jnp
from jax.experimental import pallas as pl
from jax.experimental.pallas import tpu as pltpu


def _round_up(x: int, m: int) -> int:
    return ((x + m - 1) // m) * m


# --------------------------------------------------------------------------
# Fused kernel: x -> L0 -> L1 -> ... -> L_{n-1}, everything resident in VMEM.
# refs = (x_ref, wT_0..wT_{n-1}, b_0..b_{n-1}, o_ref)
# --------------------------------------------------------------------------
def _make_fused_mlp_kernel(n_layers: int):
    def kernel(*refs):
        x_ref = refs[0]
        w_refs = refs[1 : 1 + n_layers]
        b_refs = refs[1 + n_layers : 1 + 2 * n_layers]
        o_ref = refs[1 + 2 * n_layers]

        act = x_ref[...]  # (bm, Din_pad) f32
        for w_ref, b_ref in zip(w_refs, b_refs):
            # (bm, K_pad) @ (K_pad, N_pad) on the MXU, f32 accumulate,
            # bias add in f32 on the VPU. Padded rows/cols are exact zeros,
            # so the math is bit-identical to the unpadded computation.
            act = (
                jnp.dot(act, w_ref[...], preferred_element_type=jnp.float32)
                + b_ref[...]
            )
        o_ref[...] = act.astype(o_ref.dtype)

    return kernel


# --------------------------------------------------------------------------
# Jitted forward: pad batch/features, run one fused pallas_call, slice back.
# --------------------------------------------------------------------------
@partial(jax.jit, static_argnames=("out_size",))
def mlp_forward(x, wts, bs, *, out_size):
    """wts[i]: (Din_pad_i, Dout_pad_i) pre-transposed+padded weight;
    bs[i]: (1, Dout_pad_i) padded bias. Returns (B, out_size)."""
    n_layers = len(wts)
    B, Din = x.shape
    Din_pad = wts[0].shape[0]
    Dout_pad_last = wts[-1].shape[1]

    # Batch tiling: at least 8 rows (sublane), up to 256 rows per grid step.
    B_pad = _round_up(max(B, 8), 8)
    bm = B_pad if B_pad <= 256 else 256
    B_pad = _round_up(B_pad, bm)
    n_bm = B_pad // bm

    # Zero-pad the input (zeros in padded rows/cols stay zeros through every
    # layer because weight/bias padding is zero).
    xp = jnp.zeros((B_pad, Din_pad), x.dtype).at[:B, :Din].set(x)

    in_specs = [pl.BlockSpec((bm, Din_pad), lambda i: (i, 0))]
    # Weights / biases: full-array blocks, constant index_map -> resident
    # across the batch grid (no re-DMA per tile).
    for w in wts:
        in_specs.append(pl.BlockSpec(w.shape, lambda i: (0, 0)))
    for b in bs:
        in_specs.append(pl.BlockSpec(b.shape, lambda i: (0, 0)))

    out_pad = pl.pallas_call(
        _make_fused_mlp_kernel(n_layers),
        out_shape=jax.ShapeDtypeStruct((B_pad, Dout_pad_last), x.dtype),
        grid=(n_bm,),
        in_specs=in_specs,
        out_specs=pl.BlockSpec((bm, Dout_pad_last), lambda i: (i, 0)),
        compiler_params=pltpu.CompilerParams(
            dimension_semantics=("parallel",),  # v7x: split batch tiles over 2 TCs
        ),
    )(xp, *wts, *bs)

    return out_pad[:B, :out_size]


# --------------------------------------------------------------------------
# Parameter init (torch.nn.Linear default init) + one-time pad/transpose.
# --------------------------------------------------------------------------
def init_linear_params(key, in_dim, out_dim, dtype=jnp.float32):
    """Kaiming-uniform weight, uniform bias in +-1/sqrt(fan_in) — like torch."""
    kw, kb = jax.random.split(key)
    bound = 1.0 / math.sqrt(in_dim)
    w = jax.random.uniform(kw, (out_dim, in_dim), dtype, -bound, bound)
    b = jax.random.uniform(kb, (out_dim,), dtype, -bound, bound)
    return w, b


def _pad_transpose(w, b):
    """(Dout, Din) weight + (Dout,) bias  ->  (Din_pad, Dout_pad) W^T, (1, Dout_pad) b."""
    Dout, Din = w.shape
    Din_pad = _round_up(Din, 128)
    Dout_pad = _round_up(Dout, 128)
    wT = jnp.zeros((Din_pad, Dout_pad), w.dtype).at[:Din, :Dout].set(w.T)
    bp = jnp.zeros((1, Dout_pad), b.dtype).at[0, :Dout].set(b)
    return wT, bp


class MLP:
    """JAX/Pallas port of the PyTorch MLP (manifold=None path only)."""
    # TODO(synk): hnn.HLinear (manifold is not None) has no Pallas port here.

    def __init__(self, in_size=48, out_size=10, hdims=None, key=None):
        hdims = hdims or []
        dims = [in_size] + hdims + [out_size]
        self.out_size = out_size
        key = key if key is not None else jax.random.PRNGKey(0)

        self.params = []          # original (w, b) in torch orientation (reference)
        wts, bs = [], []          # pre-transposed + padded for the kernel
        for i in range(len(dims) - 1):
            key, sub = jax.random.split(key)
            w, b = init_linear_params(sub, dims[i], dims[i + 1])
            self.params.append((w, b))
            wT, bp = _pad_transpose(w, b)
            wts.append(wT)
            bs.append(bp)
        self._wts = tuple(wts)
        self._bs = tuple(bs)

    def __call__(self, x):
        # nn.Sequential of Linears: no activations between layers (matches the
        # reference forward()). Single fused, jitted Pallas kernel.
        return mlp_forward(x, self._wts, self._bs, out_size=self.out_size)


if __name__ == "__main__":
    key = jax.random.PRNGKey(0)
    k_x, k_p = jax.random.split(key)

    # Small shapes consistent with the module: batch=4, in=48, hidden=[32,16], out=10
    B, in_size, out_size = 4, 48, 10
    hdims = [32, 16]

    x = jax.random.normal(k_x, (B, in_size), dtype=jnp.float32)

    model = MLP(in_size=in_size, out_size=out_size, hdims=hdims, key=k_p)
    y = model(x)
    y = jax.block_until_ready(y)

    # Reference check against plain JAX (same params, same math).
    ref = x
    for w, b in model.params:
        ref = ref @ w.T + b

    assert y.shape == (B, out_size)
    assert jnp.allclose(y, ref, atol=1e-5, rtol=1e-5), "mismatch vs reference"

    print("KERNEL_OK")
</pallas_src>

<mosaic_0001>
module attributes {stable_mosaic.version = 11 : i64} {
  func.func @kernel(%arg0: i32, %arg1: memref<8x128xf32, #tpu.memory_space<vmem>>, %arg2: memref<128x128xf32, #tpu.memory_space<vmem>>, %arg3: memref<128x128xf32, #tpu.memory_space<vmem>>, %arg4: memref<128x128xf32, #tpu.memory_space<vmem>>, %arg5: memref<1x128xf32, #tpu.memory_space<vmem>>, %arg6: memref<1x128xf32, #tpu.memory_space<vmem>>, %arg7: memref<1x128xf32, #tpu.memory_space<vmem>>, %arg8: memref<8x128xf32, #tpu.memory_space<vmem>>) attributes {dimension_semantics = [#tpu.dimension_semantics<parallel>], iteration_bounds = array<i64: 1>, scalar_prefetch = 0 : i64, scratch_operands = 0 : i64, tpu.core_type = #tpu.core_type<tc>, window_params = [{transform_indices = @transform_0, window_bounds = array<i64: 8, 128>}, {pipeline_mode = #tpu.pipeline_mode<synchronous>, transform_indices = @transform_1, window_bounds = array<i64: 128, 128>}, {pipeline_mode = #tpu.pipeline_mode<synchronous>, transform_indices = @transform_2, window_bounds = array<i64: 128, 128>}, {pipeline_mode = #tpu.pipeline_mode<synchronous>, transform_indices = @transform_3, window_bounds = array<i64: 128, 128>}, {pipeline_mode = #tpu.pipeline_mode<synchronous>, transform_indices = @transform_4, window_bounds = array<i64: 1, 128>}, {pipeline_mode = #tpu.pipeline_mode<synchronous>, transform_indices = @transform_5, window_bounds = array<i64: 1, 128>}, {pipeline_mode = #tpu.pipeline_mode<synchronous>, transform_indices = @transform_6, window_bounds = array<i64: 1, 128>}, {transform_indices = @transform_7, window_bounds = array<i64: 8, 128>}]} {
    %c0 = arith.constant 0 : index
    %c0_0 = arith.constant 0 : index
    %0 = vector.load %arg1[%c0, %c0_0] : memref<8x128xf32, #tpu.memory_space<vmem>>, vector<8x128xf32>
    %c0_1 = arith.constant 0 : index
    %c0_2 = arith.constant 0 : index
    %1 = vector.load %arg2[%c0_1, %c0_2] : memref<128x128xf32, #tpu.memory_space<vmem>>, vector<128x128xf32>
    %cst = arith.constant dense<0.000000e+00> : vector<8x128xf32>
    %2 = tpu.matmul %0, %1, %cst {dimension_numbers = #tpu.dot_dimension_numbers<[1], [0], [0], [1], [0, 0, 1, 1], [], []>} : vector<8x128xf32>, vector<128x128xf32>, vector<8x128xf32> -> vector<8x128xf32>
    %c0_3 = arith.constant 0 : index
    %c0_4 = arith.constant 0 : index
    %3 = vector.load %arg5[%c0_3, %c0_4] : memref<1x128xf32, #tpu.memory_space<vmem>>, vector<1x128xf32>
    %4 = vector.broadcast %3 : vector<1x128xf32> to vector<8x128xf32>
    %5 = arith.addf %2, %4 : vector<8x128xf32>
    %c0_5 = arith.constant 0 : index
    %c0_6 = arith.constant 0 : index
    %6 = vector.load %arg3[%c0_5, %c0_6] : memref<128x128xf32, #tpu.memory_space<vmem>>, vector<128x128xf32>
    %cst_7 = arith.constant dense<0.000000e+00> : vector<8x128xf32>
    %7 = tpu.matmul %5, %6, %cst_7 {dimension_numbers = #tpu.dot_dimension_numbers<[1], [0], [0], [1], [0, 0, 1, 1], [], []>} : vector<8x128xf32>, vector<128x128xf32>, vector<8x128xf32> -> vector<8x128xf32>
    %c0_8 = arith.constant 0 : index
    %c0_9 = arith.constant 0 : index
    %8 = vector.load %arg6[%c0_8, %c0_9] : memref<1x128xf32, #tpu.memory_space<vmem>>, vector<1x128xf32>
    %9 = vector.broadcast %8 : vector<1x128xf32> to vector<8x128xf32>
    %10 = arith.addf %7, %9 : vector<8x128xf32>
    %c0_10 = arith.constant 0 : index
    %c0_11 = arith.constant 0 : index
    %11 = vector.load %arg4[%c0_10, %c0_11] : memref<128x128xf32, #tpu.memory_space<vmem>>, vector<128x128xf32>
    %cst_12 = arith.constant dense<0.000000e+00> : vector<8x128xf32>
    %12 = tpu.matmul %10, %11, %cst_12 {dimension_numbers = #tpu.dot_dimension_numbers<[1], [0], [0], [1], [0, 0, 1, 1], [], []>} : vector<8x128xf32>, vector<128x128xf32>, vector<8x128xf32> -> vector<8x128xf32>
    %c0_13 = arith.constant 0 : index
    %c0_14 = arith.constant 0 : index
    %13 = vector.load %arg7[%c0_13, %c0_14] : memref<1x128xf32, #tpu.memory_space<vmem>>, vector<1x128xf32>
    %14 = vector.broadcast %13 : vector<1x128xf32> to vector<8x128xf32>
    %15 = arith.addf %12, %14 : vector<8x128xf32>
    %c0_15 = arith.constant 0 : index
    %c0_16 = arith.constant 0 : index
    %16 = vector.load %arg8[%c0_15, %c0_16] : memref<8x128xf32, #tpu.memory_space<vmem>>, vector<8x128xf32>
    tpu.vector_store %arg8[%c0_15, %c0_16], %15 {strides = array<i32>} : memref<8x128xf32, #tpu.memory_space<vmem>>, vector<8x128xf32>,
    return
  }
  func.func @transform_0(%arg0: i32) -> (i32, i32) {
    %c0_i32 = arith.constant 0 : i32
    %c0_i32_0 = arith.constant 0 : i32
    return %arg0, %c0_i32 : i32, i32
  }
  func.func @transform_1(%arg0: i32) -> (i32, i32) {
    %c0_i32 = arith.constant 0 : i32
    %c0_i32_0 = arith.constant 0 : i32
    %c0_i32_1 = arith.constant 0 : i32
    return %c0_i32, %c0_i32_0 : i32, i32
  }
  func.func @transform_2(%arg0: i32) -> (i32, i32) {
    %c0_i32 = arith.constant 0 : i32
    %c0_i32_0 = arith.constant 0 : i32
    %c0_i32_1 = arith.constant 0 : i32
    return %c0_i32, %c0_i32_0 : i32, i32
  }
  func.func @transform_3(%arg0: i32) -> (i32, i32) {
    %c0_i32 = arith.constant 0 : i32
    %c0_i32_0 = arith.constant 0 : i32
    %c0_i32_1 = arith.constant 0 : i32
    return %c0_i32, %c0_i32_0 : i32, i32
  }
  func.func @transform_4(%arg0: i32) -> (i32, i32) {
    %c0_i32 = arith.constant 0 : i32
    %c0_i32_0 = arith.constant 0 : i32
    %c0_i32_1 = arith.constant 0 : i32
    return %c0_i32, %c0_i32_0 : i32, i32
  }
  func.func @transform_5(%arg0: i32) -> (i32, i32) {
    %c0_i32 = arith.constant 0 : i32
    %c0_i32_0 = arith.constant 0 : i32
    %c0_i32_1 = arith.constant 0 : i32
    return %c0_i32, %c0_i32_0 : i32, i32
  }
  func.func @transform_6(%arg0: i32) -> (i32, i32) {
    %c0_i32 = arith.constant 0 : i32
    %c0_i32_0 = arith.constant 0 : i32
    %c0_i32_1 = arith.constant 0 : i32
    return %c0_i32, %c0_i32_0 : i32, i32
  }
  func.func @transform_7(%arg0: i32) -> (i32, i32) {
    %c0_i32 = arith.constant 0 : i32
    %c0_i32_0 = arith.constant 0 : i32
    return %arg0, %c0_i32 : i32, i32
  }
}

</mosaic_0001>

<llo_original>
// kernel: mlp_forward.1
$region0: #{mlp_forward.1}
  #allocation0 [shape = 'u32[]', space=smem, size = 0x4, offset = 0x4, fixed_abs, tag = 'smem constant byte address 0x4 - core index']
  #allocation1 [shape = 'u32[144,128]{1,0:T(1,128)}', space=vmem, size = 0x12000, scoped, tag = 'internal scratch']
  %s0 = inlined_call_operand.vmem [shape: f32[8,128], index: 0, kind: input, shape index: {}]
  %s1 = inlined_call_operand.hbm [shape: f32[128,128], index: 1, kind: input, shape index: {}]
  %s2 = inlined_call_operand.hbm [shape: f32[128,128], index: 2, kind: input, shape index: {}]
  %s3 = inlined_call_operand.hbm [shape: f32[128,128], index: 3, kind: input, shape index: {}]
  %s4 = inlined_call_operand.vmem [shape: f32[1,128], index: 4, kind: input, shape index: {}]
  %s5 = inlined_call_operand.vmem [shape: f32[1,128], index: 5, kind: input, shape index: {}]
  %s6 = inlined_call_operand.vmem [shape: f32[1,128], index: 6, kind: input, shape index: {}]
  %s7 = inlined_call_operand.vmem [shape: f32[8,128], index: 7, kind: output, shape index: {}]
  %s8 = sld [smem:[#allocation0]]
  $region50: #{mlp_forward.1} parent=0
    _
  %s10 = ssub.s32 1, %s8
  %s11 = scalar_select 0, %s10, %s8
  $region1: #{mlp_forward.1} parent=0
    #allocation2 [shape = 'u8[65536]{0}', space=vmem, size = 0x10000, scoped, tag = 'input window, operand 1, single buffered']
    #allocation3 [shape = 's32[1]{0}', space=sflag, size = 0x4, scoped, tag = 'scoped memory for mlp_forward.1']
    #allocation4 [shape = 'u8[65536]{0}', space=vmem, size = 0x10000, scoped, tag = 'input window, operand 2, single buffered']
    #allocation5 [shape = 's32[1]{0}', space=sflag, size = 0x4, scoped, tag = 'scoped memory for mlp_forward.1']
    #allocation6 [shape = 'u8[65536]{0}', space=vmem, size = 0x10000, scoped, tag = 'input window, operand 3, single buffered']
    %12 = vsyncpa [#allocation3], 0
    %13 = vsyncpa [#allocation5], 0
    // Predicated region
    $region2: #{mlp_forward.1} parent=1 // pred_check
      _
    $region3: #{mlp_forward.1} parent=1 // pred_check_branch
      %15 = sbr.rel (0) target = $region5
    $region4: #{mlp_forward.1} parent=1 // pred_region
      _
    $region5: #{mlp_forward.1} parent=1 // pred_fallthru
      _
    // Predicated region
    $region6: #{mlp_forward.1} parent=1 // pred_check
      _
    $region7: #{mlp_forward.1} parent=1 // pred_check_branch
      %17 = sbr.rel (0) target = $region9
    $region8: #{mlp_forward.1} parent=1 // pred_region
      %s19 = ssub.s32 2048, 2048
      %20 = vsyncadd [#allocation3], %s19
      %s21 = sshll.u32 [#allocation2], 4
      %s22 = int_to_ptr.vmem [resolvable:$true] %s21
      %27 = dma.hbm_to_vmem [thread:$0]  %s1, 2048, %s22, [#allocation3], 128, 128, 8
    $region9: #{mlp_forward.1} parent=1 // pred_fallthru
      _
    // Predicated region
    $region10: #{mlp_forward.1} parent=1 // pred_check
      _
    $region11: #{mlp_forward.1} parent=1 // pred_check_branch
      %29 = sbr.rel (0) target = $region13
    $region12: #{mlp_forward.1} parent=1 // pred_region
      %s31 = ssub.s32 2048, 2048
      %32 = vsyncadd [#allocation5], %s31
      %s33 = sshll.u32 [#allocation4], 4
      %s34 = int_to_ptr.vmem [resolvable:$true] %s33
      %39 = dma.hbm_to_vmem [thread:$0]  %s2, 2048, %s34, [#allocation5], 128, 128, 8
    $region13: #{mlp_forward.1} parent=1 // pred_fallthru
      _
    // Predicated region
    $region14: #{mlp_forward.1} parent=1 // pred_check
      _
    $region15: #{mlp_forward.1} parent=1 // pred_check_branch
      %41 = sbr.rel (0) target = $region17
    $region16: #{mlp_forward.1} parent=1 // pred_region
      %s43 = ssub.s32 2048, 2048
      %44 = vsyncadd [#allocation5], %s43
      %s45 = sshll.u32 [#allocation6], 4
      %s46 = int_to_ptr.vmem [resolvable:$true] %s45
      %51 = dma.hbm_to_vmem [thread:$0]  %s3, 2048, %s46, [#allocation5], 128, 128, 8
    $region17: #{mlp_forward.1} parent=1 // pred_fallthru
      _
    // Predicated region
    $region18: #{mlp_forward.1} parent=1 // pred_check
      _
    $region19: #{mlp_forward.1} parent=1 // pred_check_branch
      %53 = sbr.rel (0) target = $region21
    $region20: #{mlp_forward.1} parent=1 // pred_region
      _
    $region21: #{mlp_forward.1} parent=1 // pred_fallthru
      _
    // Predicated region
    $region22: #{mlp_forward.1} parent=1 // pred_check
      _
    $region23: #{mlp_forward.1} parent=1 // pred_check_branch
      %55 = sbr.rel (0) target = $region25
    $region24: #{mlp_forward.1} parent=1 // pred_region
      _
    $region25: #{mlp_forward.1} parent=1 // pred_fallthru
      _
    // Predicated region
    $region26: #{mlp_forward.1} parent=1 // pred_check
      _
    $region27: #{mlp_forward.1} parent=1 // pred_check_branch
      %57 = sbr.rel (0) target = $region29
    $region28: #{mlp_forward.1} parent=1 // pred_region
      _
    $region29: #{mlp_forward.1} parent=1 // pred_fallthru
      _
    // Predicated region
    $region30: #{mlp_forward.1} parent=1 // pred_check
      _
    $region31: #{mlp_forward.1} parent=1 // pred_check_branch
      %59 = sbr.rel (0) target = $region33
    $region32: #{mlp_forward.1} parent=1 // pred_region
      %60 = dma.done [#allocation3], 2048
    $region33: #{mlp_forward.1} parent=1 // pred_fallthru
      _
    // Predicated region
    $region34: #{mlp_forward.1} parent=1 // pred_check
      _
    $region35: #{mlp_forward.1} parent=1 // pred_check_branch
      %62 = sbr.rel (0) target = $region37
    $region36: #{mlp_forward.1} parent=1 // pred_region
      %63 = dma.done [#allocation5], 2048
    $region37: #{mlp_forward.1} parent=1 // pred_fallthru
      _
    // Predicated region
    $region38: #{mlp_forward.1} parent=1 // pred_check
      _
    $region39: #{mlp_forward.1} parent=1 // pred_check_branch
      %65 = sbr.rel (0) target = $region41
    $region40: #{mlp_forward.1} parent=1 // pred_region
      %66 = dma.done [#allocation5], 2048
    $region41: #{mlp_forward.1} parent=1 // pred_fallthru
      _
    %v67 = vld [vmem:[%s0] sm:$0xff]
    %v68 = vld [vmem:[#allocation2] sm:$0xff]
    %v69 = vld [vmem:[#allocation2 + $0x8] sm:$0xff]
    %v70 = vld [vmem:[#allocation2 + $0x10] sm:$0xff]
    %v71 = vld [vmem:[#allocation2 + $0x18] sm:$0xff]
    %v72 = vld [vmem:[#allocation2 + $0x20] sm:$0xff]
    %v73 = vld [vmem:[#allocation2 + $0x28] sm:$0xff]
    %v74 = vld [vmem:[#allocation2 + $0x30] sm:$0xff]
    %v75 = vld [vmem:[#allocation2 + $0x38] sm:$0xff]
    %v76 = vld [vmem:[#allocation2 + $0x40] sm:$0xff]
    %v77 = vld [vmem:[#allocation2 + $0x48] sm:$0xff]
    %v78 = vld [vmem:[#allocation2 + $0x50] sm:$0xff]
    %v79 = vld [vmem:[#allocation2 + $0x58] sm:$0xff]
    %v80 = vld [vmem:[#allocation2 + $0x60] sm:$0xff]
    %v81 = vld [vmem:[#allocation2 + $0x68] sm:$0xff]
    %v82 = vld [vmem:[#allocation2 + $0x70] sm:$0xff]
    %v83 = vld [vmem:[#allocation2 + $0x78] sm:$0xff]
    %v84 = vld [vmem:[%s4] sm:$0x1]
    %v86 = vlaneseq
    %v87 = vshrl.u32 %v86, 7
    %v88 = vsub.s32 0, %v87
    %v89 = vrot.slane %v84, %v88
    %91 = vmatprep.subr.mxu0 0.0
    %92 = vmatpush1.msra.mxu0 %v68
    %93 = vmatprep.subr.mxu0 0.0
    %94 = vmatpush1.msra.mxu0 %v69
    %95 = vmatprep.subr.mxu0 0.0
    %96 = vmatpush1.msra.mxu0 %v70
    %97 = vmatprep.subr.mxu0 0.0
    %98 = vmatpush1.msra.mxu0 %v71
    %99 = vmatprep.subr.mxu0 0.0
    %100 = vmatpush1.msra.mxu0 %v72
    %101 = vmatprep.subr.mxu0 0.0
    %102 = vmatpush1.msra.mxu0 %v73
    %103 = vmatprep.subr.mxu0 0.0
    %104 = vmatpush1.msra.mxu0 %v74
    %105 = vmatprep.subr.mxu0 0.0
    %106 = vmatpush1.msra.mxu0 %v75
    %107 = vmatprep.subr.mxu0 0.0
    %108 = vmatpush1.msra.mxu0 %v76
    %109 = vmatprep.subr.mxu0 0.0
    %110 = vmatpush1.msra.mxu0 %v77
    %111 = vmatprep.subr.mxu0 0.0
    %112 = vmatpush1.msra.mxu0 %v78
    %113 = vmatprep.subr.mxu0 0.0
    %114 = vmatpush1.msra.mxu0 %v79
    %115 = vmatprep.subr.mxu0 0.0
    %116 = vmatpush1.msra.mxu0 %v80
    %117 = vmatprep.subr.mxu0 0.0
    %118 = vmatpush1.msra.mxu0 %v81
    %119 = vmatprep.subr.mxu0 0.0
    %120 = vmatpush1.msra.mxu0 %v82
    %121 = vmatprep.subr.mxu0 0.0
    %122 = vmatpush1.msra.mxu0 %v83
    %123 = vmatprep.subr.mxu0 0.0
    %124 = vmatpush1.msra.mxu0 0.0
    %125 = vmatprep.subr.mxu0 0.0
    %126 = vmatpush1.msra.mxu0 0.0
    %127 = vmatprep.subr.mxu0 0.0
    %128 = vmatpush1.msra.mxu0 0.0
    %129 = vmatprep.subr.mxu0 0.0
    %130 = vmatpush1.msra.mxu0 0.0
    %131 = vmatprep.subr.mxu0 0.0
    %132 = vmatpush1.msra.mxu0 0.0
    %133 = vmatprep.subr.mxu0 0.0
    %134 = vmatpush1.msra.mxu0 0.0
    %135 = vmatprep.subr.mxu0 0.0
    %136 = vmatpush1.msra.mxu0 0.0
    %137 = vmatprep.subr.mxu0 0.0
    %138 = vmatpush1.msra.mxu0 0.0
    %139 = vmatprep.subr.mxu0 0.0
    %140 = vmatpush1.msra.mxu0 0.0
    %141 = vmatprep.subr.mxu0 0.0
    %142 = vmatpush1.msra.mxu0 0.0
    %143 = vmatprep.subr.mxu0 0.0
    %144 = vmatpush1.msra.mxu0 0.0
    %145 = vmatprep.subr.mxu0 0.0
    %146 = vmatpush1.msra.mxu0 0.0
    %147 = vmatprep.subr.mxu0 0.0
    %148 = vmatpush1.msra.mxu0 0.0
    %149 = vmatprep.subr.mxu0 0.0
    %150 = vmatpush1.msra.mxu0 0.0
    %151 = vmatprep.subr.mxu0 0.0
    %152 = vmatpush1.msra.mxu0 0.0
    %153 = vmatprep.subr.mxu0 0.0
    %154 = vmatpush1.msra.mxu0 0.0
    %155 = vmatprep.mubr.f32.mxu0 0.0
    %156 = vmatmul.mubr.f32.gmra.mrb[0].mxu0 %v67
    %v157 = vpop.f32.mrb[0].mxu0
    %v158 = vadd.f32 %v89, %v157
    %v159 = vpop.f32.mrb[0].mxu0
    %160 = vdwg.mxu0
    %v161 = vld [vmem:[#allocation4] sm:$0xff]
    %v162 = vld [vmem:[#allocation4 + $0x8] sm:$0xff]
    %v163 = vld [vmem:[#allocation4 + $0x10] sm:$0xff]
    %v164 = vld [vmem:[#allocation4 + $0x18] sm:$0xff]
    %v165 = vld [vmem:[#allocation4 + $0x20] sm:$0xff]
    %v166 = vld [vmem:[#allocation4 + $0x28] sm:$0xff]
    %v167 = vld [vmem:[#allocation4 + $0x30] sm:$0xff]
    %v168 = vld [vmem:[#allocation4 + $0x38] sm:$0xff]
    %v169 = vld [vmem:[#allocation4 + $0x40] sm:$0xff]
    %v170 = vld [vmem:[#allocation4 + $0x48] sm:$0xff]
    %v171 = vld [vmem:[#allocation4 + $0x50] sm:$0xff]
    %v172 = vld [vmem:[#allocation4 + $0x58] sm:$0xff]
    %v173 = vld [vmem:[#allocation4 + $0x60] sm:$0xff]
    %v174 = vld [vmem:[#allocation4 + $0x68] sm:$0xff]
    %v175 = vld [vmem:[#allocation4 + $0x70] sm:$0xff]
    %v176 = vld [vmem:[#allocation4 + $0x78] sm:$0xff]
    %v177 = vld [vmem:[%s5] sm:$0x1]
    %v179 = vlaneseq
    %v180 = vshrl.u32 %v179, 7
    %v181 = vsub.s32 0, %v180
    %v182 = vrot.slane %v177, %v181
    %184 = vmatprep.subr.mxu0 0.0
    %185 = vmatpush1.msra.mxu0 %v161
    %186 = vmatprep.subr.mxu0 0.0
    %187 = vmatpush1.msra.mxu0 %v162
    %188 = vmatprep.subr.mxu0 0.0
    %189 = vmatpush1.msra.mxu0 %v163
    %190 = vmatprep.subr.mxu0 0.0
    %191 = vmatpush1.msra.mxu0 %v164
    %192 = vmatprep.subr.mxu0 0.0
    %193 = vmatpush1.msra.mxu0 %v165
    %194 = vmatprep.subr.mxu0 0.0
    %195 = vmatpush1.msra.mxu0 %v166
    %196 = vmatprep.subr.mxu0 0.0
    %197 = vmatpush1.msra.mxu0 %v167
    %198 = vmatprep.subr.mxu0 0.0
    %199 = vmatpush1.msra.mxu0 %v168
    %200 = vmatprep.subr.mxu0 0.0
    %201 = vmatpush1.msra.mxu0 %v169
    %202 = vmatprep.subr.mxu0 0.0
    %203 = vmatpush1.msra.mxu0 %v170
    %204 = vmatprep.subr.mxu0 0.0
    %205 = vmatpush1.msra.mxu0 %v171
    %206 = vmatprep.subr.mxu0 0.0
    %207 = vmatpush1.msra.mxu0 %v172
    %208 = vmatprep.subr.mxu0 0.0
    %209 = vmatpush1.msra.mxu0 %v173
    %210 = vmatprep.subr.mxu0 0.0
    %211 = vmatpush1.msra.mxu0 %v174
    %212 = vmatprep.subr.mxu0 0.0
    %213 = vmatpush1.msra.mxu0 %v175
    %214 = vmatprep.subr.mxu0 0.0
    %215 = vmatpush1.msra.mxu0 %v176
    %216 = vmatprep.subr.mxu0 0.0
    %217 = vmatpush1.msra.mxu0 0.0
    %218 = vmatprep.subr.mxu0 0.0
    %219 = vmatpush1.msra.mxu0 0.0
    %220 = vmatprep.subr.mxu0 0.0
    %221 = vmatpush1.msra.mxu0 0.0
    %222 = vmatprep.subr.mxu0 0.0
    %223 = vmatpush1.msra.mxu0 0.0
    %224 = vmatprep.subr.mxu0 0.0
    %225 = vmatpush1.msra.mxu0 0.0
    %226 = vmatprep.subr.mxu0 0.0
    %227 = vmatpush1.msra.mxu0 0.0
    %228 = vmatprep.subr.mxu0 0.0
    %229 = vmatpush1.msra.mxu0 0.0
    %230 = vmatprep.subr.mxu0 0.0
    %231 = vmatpush1.msra.mxu0 0.0
    %232 = vmatprep.subr.mxu0 0.0
    %233 = vmatpush1.msra.mxu0 0.0
    %234 = vmatprep.subr.mxu0 0.0
    %235 = vmatpush1.msra.mxu0 0.0
    %236 = vmatprep.subr.mxu0 0.0
    %237 = vmatpush1.msra.mxu0 0.0
    %238 = vmatprep.subr.mxu0 0.0
    %239 = vmatpush1.msra.mxu0 0.0
    %240 = vmatprep.subr.mxu0 0.0
    %241 = vmatpush1.msra.mxu0 0.0
    %242 = vmatprep.subr.mxu0 0.0
    %243 = vmatpush1.msra.mxu0 0.0
    %244 = vmatprep.subr.mxu0 0.0
    %245 = vmatpush1.msra.mxu0 0.0
    %246 = vmatprep.subr.mxu0 0.0
    %247 = vmatpush1.msra.mxu0 0.0
    %248 = vmatprep.mubr.f32.mxu0 0.0
    %249 = vmatmul.mubr.f32.gmra.mrb[0].mxu0 %v158
    %v250 = vpop.f32.mrb[0].mxu0
    %v251 = vadd.f32 %v182, %v250
    %v252 = vpop.f32.mrb[0].mxu0
    %253 = vdwg.mxu0
    %v254 = vld [vmem:[#allocation6] sm:$0xff]
    %v255 = vld [vmem:[#allocation6 + $0x8] sm:$0xff]
    %v256 = vld [vmem:[#allocation6 + $0x10] sm:$0xff]
    %v257 = vld [vmem:[#allocation6 + $0x18] sm:$0xff]
    %v258 = vld [vmem:[#allocation6 + $0x20] sm:$0xff]
    %v259 = vld [vmem:[#allocation6 + $0x28] sm:$0xff]
    %v260 = vld [vmem:[#allocation6 + $0x30] sm:$0xff]
    %v261 = vld [vmem:[#allocation6 + $0x38] sm:$0xff]
    %v262 = vld [vmem:[#allocation6 + $0x40] sm:$0xff]
    %v263 = vld [vmem:[#allocation6 + $0x48] sm:$0xff]
    %v264 = vld [vmem:[#allocation6 + $0x50] sm:$0xff]
    %v265 = vld [vmem:[#allocation6 + $0x58] sm:$0xff]
    %v266 = vld [vmem:[#allocation6 + $0x60] sm:$0xff]
    %v267 = vld [vmem:[#allocation6 + $0x68] sm:$0xff]
    %v268 = vld [vmem:[#allocation6 + $0x70] sm:$0xff]
    %v269 = vld [vmem:[#allocation6 + $0x78] sm:$0xff]
    %v270 = vld [vmem:[%s6] sm:$0x1]
    %v272 = vlaneseq
    %v273 = vshrl.u32 %v272, 7
    %v274 = vsub.s32 0, %v273
    %v275 = vrot.slane %v270, %v274
    %277 = vmatprep.subr.mxu0 0.0
    %278 = vmatpush1.msra.mxu0 %v254
    %279 = vmatprep.subr.mxu0 0.0
    %280 = vmatpush1.msra.mxu0 %v255
    %281 = vmatprep.subr.mxu0 0.0
    %282 = vmatpush1.msra.mxu0 %v256
    %283 = vmatprep.subr.mxu0 0.0
    %284 = vmatpush1.msra.mxu0 %v257
    %285 = vmatprep.subr.mxu0 0.0
    %286 = vmatpush1.msra.mxu0 %v258
    %287 = vmatprep.subr.mxu0 0.0
    %288 = vmatpush1.msra.mxu0 %v259
    %289 = vmatprep.subr.mxu0 0.0
    %290 = vmatpush1.msra.mxu0 %v260
    %291 = vmatprep.subr.mxu0 0.0
    %292 = vmatpush1.msra.mxu0 %v261
    %293 = vmatprep.subr.mxu0 0.0
    %294 = vmatpush1.msra.mxu0 %v262
    %295 = vmatprep.subr.mxu0 0.0
    %296 = vmatpush1.msra.mxu0 %v263
    %297 = vmatprep.subr.mxu0 0.0
    %298 = vmatpush1.msra.mxu0 %v264
    %299 = vmatprep.subr.mxu0 0.0
    %300 = vmatpush1.msra.mxu0 %v265
    %301 = vmatprep.subr.mxu0 0.0
    %302 = vmatpush1.msra.mxu0 %v266
    %303 = vmatprep.subr.mxu0 0.0
    %304 = vmatpush1.msra.mxu0 %v267
    %305 = vmatprep.subr.mxu0 0.0
    %306 = vmatpush1.msra.mxu0 %v268
    %307 = vmatprep.subr.mxu0 0.0
    %308 = vmatpush1.msra.mxu0 %v269
    %309 = vmatprep.subr.mxu0 0.0
    %310 = vmatpush1.msra.mxu0 0.0
    %311 = vmatprep.subr.mxu0 0.0
    %312 = vmatpush1.msra.mxu0 0.0
    %313 = vmatprep.subr.mxu0 0.0
    %314 = vmatpush1.msra.mxu0 0.0
    %315 = vmatprep.subr.mxu0 0.0
    %316 = vmatpush1.msra.mxu0 0.0
    %317 = vmatprep.subr.mxu0 0.0
    %318 = vmatpush1.msra.mxu0 0.0
    %319 = vmatprep.subr.mxu0 0.0
    %320 = vmatpush1.msra.mxu0 0.0
    %321 = vmatprep.subr.mxu0 0.0
    %322 = vmatpush1.msra.mxu0 0.0
    %323 = vmatprep.subr.mxu0 0.0
    %324 = vmatpush1.msra.mxu0 0.0
    %325 = vmatprep.subr.mxu0 0.0
    %326 = vmatpush1.msra.mxu0 0.0
    %327 = vmatprep.subr.mxu0 0.0
    %328 = vmatpush1.msra.mxu0 0.0
    %329 = vmatprep.subr.mxu0 0.0
    %330 = vmatpush1.msra.mxu0 0.0
    %331 = vmatprep.subr.mxu0 0.0
    %332 = vmatpush1.msra.mxu0 0.0
    %333 = vmatprep.subr.mxu0 0.0
    %334 = vmatpush1.msra.mxu0 0.0
    %335 = vmatprep.subr.mxu0 0.0
    %336 = vmatpush1.msra.mxu0 0.0
    %337 = vmatprep.subr.mxu0 0.0
    %338 = vmatpush1.msra.mxu0 0.0
    %339 = vmatprep.subr.mxu0 0.0
    %340 = vmatpush1.msra.mxu0 0.0
    %341 = vmatprep.mubr.f32.mxu0 0.0
    %342 = vmatmul.mubr.f32.gmra.mrb[0].mxu0 %v251
    %v343 = vpop.f32.mrb[0].mxu0
    %v344 = vadd.f32 %v275, %v343
    %v345 = vpop.f32.mrb[0].mxu0
    %346 = vdwg.mxu0
    %347 = vst [vmem:[%s7] sm:$0xff] %v344
    // Predicated region
    $region42: #{mlp_forward.1} parent=1 // pred_check
      _
    $region43: #{mlp_forward.1} parent=1 // pred_check_branch
      %349 = sbr.rel (0) target = $region45
    $region44: #{mlp_forward.1} parent=1 // pred_region
      _
    $region45: #{mlp_forward.1} parent=1 // pred_fallthru
      _
    // Predicated region
    $region46: #{mlp_forward.1} parent=1 // pred_check
      _
    $region47: #{mlp_forward.1} parent=1 // pred_check_branch
      %351 = sbr.rel (0) target = $region49
    $region48: #{mlp_forward.1} parent=1 // pred_region
      _
    $region49: #{mlp_forward.1} parent=1 // pred_fallthru
      _
    %352 = vsyncpa [#allocation3], 1
    %353 = vsyncpa [#allocation5], 1

</llo_original>
